<compile_context>
chip_gen: v7x
topology: tpu7x:2x2x1
jax: 0.10.0
libtpu: 0.0.40
codegen_flags: <defaults>
</compile_context>

<pallas_src>
import functools
import math

import jax
import jax.numpy as jnp
from jax.experimental import pallas as pl
from jax.experimental.pallas import tpu as pltpu


# ----------------------------------------------------------------------------
# Kernel
# ----------------------------------------------------------------------------
def _minus_alpha0_kernel(x_ref, wt_ref, b_ref, o_ref, acc_ref, *,
                         d_total, needs_mask, compute_dtype):
    # x_ref:  (tm, td)  input dtype      wt_ref: (K, td)  input dtype
    # b_ref:  (K, 1)    f32              o_ref:  (1, 8, tm) f32
    # acc_ref:(K, tm)   f32 scratch (persists across the inner d axis)
    d_idx = pl.program_id(1)

    @pl.when(d_idx == 0)
    def _init():
        acc_ref[...] = jnp.zeros_like(acc_ref)

    x = x_ref[...]
    wt = wt_ref[...]
    if needs_mask:
        # Last feature tile extends past D: zero the out-of-range columns of
        # both operands so garbage reads cannot contaminate the accumulator.
        td = x.shape[-1]
        base = d_idx * td
        xcol = jax.lax.broadcasted_iota(jnp.int32, x.shape, 1) + base
        x = jnp.where(xcol < d_total, x, 0)
        wcol = jax.lax.broadcasted_iota(jnp.int32, wt.shape, 1) + base
        wt = jnp.where(wcol < d_total, wt, 0)

    # (K, tm) += (K, td) . (tm, td)^T  — A·Bᵀ on the MXU, f32 accumulation.
    acc_ref[...] += jax.lax.dot_general(
        wt.astype(compute_dtype), x.astype(compute_dtype),
        dimension_numbers=(((1,), (1,)), ((), ())),
        preferred_element_type=jnp.float32)

    @pl.when(d_idx == pl.num_programs(1) - 1)
    def _finalize():
        logits = acc_ref[...] + b_ref[...]                  # (K, tm)
        n_cls = logits.shape[0]
        # sum_k alpha = sum_k softplus(logits) + K   (exact fold of the "+1")
        tot = jnp.sum(jax.nn.softplus(logits), axis=0, keepdims=True)  # (1, tm)
        # Lane-dense store: broadcast the (1, tm) row across 8 sublanes.
        o_ref[...] = jnp.broadcast_to(-(tot + jnp.float32(n_cls)), o_ref.shape)


# ----------------------------------------------------------------------------
# Tile selection
# ----------------------------------------------------------------------------
_VMEM_WORKSET_BUDGET = 24 * 1024 * 1024   # double-buffered X + W^T tiles


def _round_up(x, m):
    return (x + m - 1) // m * m


def _choose_tiles(B, D, K, bpe):
    """Pick (batch_tile tm, feature_tile td) for the (batch, feature) grid."""
    b8 = _round_up(max(B, 1), 8)
    kp = max(_round_up(K, 8), 8)            # W^T sublane footprint

    # --- full-D path: X tile (tm, D), W^T tile (K, D) resident -------------
    w_cost = 2 * kp * D * bpe
    rows = 0
    if w_cost < _VMEM_WORKSET_BUDGET:
        rows = (_VMEM_WORKSET_BUDGET - w_cost) // (2 * D * bpe) // 8 * 8
    if rows >= min(256, b8):
        tm = min(rows, 4096)
        # >=4 grid steps for big batches (v7x megacore + pipelining), but stay
        # >=256 rows (measured ~85%+ of HBM roofline at >=512-row tiles).
        tm = min(tm, max(256, _round_up(pl.cdiv(B, 4), 8)))
        tm = max(8, min(tm, b8))
        return tm, D

    # --- large-D path: tile the reduction axis too --------------------------
    tm = max(8, min(512, b8))
    td = _VMEM_WORKSET_BUDGET // (2 * bpe * (tm + kp))
    td = max(td // 128 * 128, 128)
    td = min(td, _round_up(D, 128))
    return tm, td


# ----------------------------------------------------------------------------
# Wrapper
# ----------------------------------------------------------------------------
def minus_alpha0_predictor(x, w, b, *, compute_dtype=jnp.bfloat16, _tiles=None):
    """x: (B, C, H, W) (any trailing dims); w: (D, K); b: (K,)  ->  (B, 1) f32.

    compute_dtype is the MXU input dtype (bf16 by default; pass jnp.float32
    for bit-closer numerics — the kernel stays HBM-bound either way).
    """
    B = x.shape[0]
    D = math.prod(x.shape[1:])
    Dw, K = w.shape
    assert Dw == D, (Dw, D)

    x_flat = x.reshape(B, D)                     # free view; NO dtype cast here
    wt = jnp.transpose(w)                        # (K, D), tiny one-time cost
    b2 = b.reshape(K, 1).astype(jnp.float32)

    bpe = x_flat.dtype.itemsize
    bpe_w = wt.dtype.itemsize
    if _tiles is None:
        tm, td = _choose_tiles(B, D, K, bpe)
    else:
        tm, td = _tiles                          # testing hook

    num_m = pl.cdiv(B, tm)
    num_d = pl.cdiv(D, td)
    needs_mask = (D % td) != 0

    kernel = functools.partial(
        _minus_alpha0_kernel, d_total=D, needs_mask=needs_mask,
        compute_dtype=compute_dtype)

    kp = max(K, 8)
    est_vmem = (2 * tm * td * bpe                 # X, double-buffered
                + 2 * kp * td * bpe_w             # W^T, double-buffered
                + 2 * 8 * max(tm, 128) * 4        # output slab, double-buffered
                + kp * max(tm, 128) * 4           # accumulator scratch
                + (1 << 16))                      # bias + slack
    vmem_limit = int(min(max(est_vmem + (8 << 20), 32 << 20), 48 << 20))

    cost = pl.CostEstimate(
        flops=2 * B * D * K,
        transcendentals=2 * B * K,                # softplus = exp + log1p
        bytes_accessed=(num_m * tm * D * bpe                       # X stream
                        + (num_m if num_d > 1 else 1) * D * K * bpe_w
                        + K * 4
                        + num_m * 8 * tm * 4))

    out3 = pl.pallas_call(
        kernel,
        out_shape=jax.ShapeDtypeStruct((num_m, 8, tm), jnp.float32),
        grid_spec=pltpu.PrefetchScalarGridSpec(
            num_scalar_prefetch=0,
            grid=(num_m, num_d),
            in_specs=[
                pl.BlockSpec((tm, td), lambda i, d: (i, d)),   # X streamed
                pl.BlockSpec((K, td), lambda i, d: (0, d)),    # W^T along D
                pl.BlockSpec((K, 1), lambda i, d: (0, 0)),     # bias resident
            ],
            out_specs=pl.BlockSpec((1, 8, tm), lambda i, d: (i, 0, 0)),
            scratch_shapes=[pltpu.VMEM((K, tm), jnp.float32)],
        ),
        compiler_params=pltpu.CompilerParams(
            dimension_semantics=("parallel", "arbitrary"),
            vmem_limit_bytes=vmem_limit),
        cost_estimate=cost,
    )(x_flat, wt, b2)

    # (num_m, 8, tm) lane-dense slab -> (B, 1); slice off ragged-tile lanes.
    return out3[:, 0, :].reshape(num_m * tm)[:B].reshape(B, 1)


# ----------------------------------------------------------------------------
# Pure-JAX reference (same rounding as the kernel's compute dtype)
# ----------------------------------------------------------------------------
def _reference(x, w, b, compute_dtype=jnp.bfloat16):
    B = x.shape[0]
    xc = x.reshape(B, -1).astype(compute_dtype).astype(jnp.float32)
    wc = w.astype(compute_dtype).astype(jnp.float32)
    logits = xc @ wc + b.astype(jnp.float32)
    alpha = jax.nn.softplus(logits) + 1.0
    return -jnp.sum(alpha, axis=-1, keepdims=True)


if __name__ == "__main__":
    key = jax.random.PRNGKey(0)
    kx, kw, kb, kx2 = jax.random.split(key, 4)

    C, H, W_ = 4, 16, 16
    K = 8
    D = C * H * W_

    w = jax.random.normal(kw, (D, K), dtype=jnp.float32) * 0.05
    b = jax.random.normal(kb, (K,), dtype=jnp.float32) * 0.1

    # 1) Canonical small shape: single full-D tile, single batch tile.
    x = jax.random.normal(kx, (2, C, H, W_), dtype=jnp.float32)
    out = jax.block_until_ready(minus_alpha0_predictor(x, w, b))
    ref = _reference(x, w, b)
    assert out.shape == (2, 1), out.shape
    assert jnp.allclose(out, ref, atol=1e-2, rtol=1e-3), (out, ref)

    # 2) Exercise the D-tiled / ragged path: multi batch tiles (ragged last),
    #    3 feature tiles with masking of the partial last tile.
    x2 = jax.random.normal(kx2, (20, C, H, W_), dtype=jnp.float32)
    out2 = jax.block_until_ready(
        minus_alpha0_predictor(x2, w, b, _tiles=(8, 384)))
    ref2 = _reference(x2, w, b)
    assert out2.shape == (20, 1), out2.shape
    assert jnp.allclose(out2, ref2, atol=1e-2, rtol=1e-3), (out2, ref2)

    print("KERNEL_OK")
</pallas_src>

<mosaic_0001>
module attributes {stable_mosaic.version = 11 : i64} {
  func.func @_minus_alpha0_kernel(%arg0: i32, %arg1: i32, %arg2: memref<8x1024xf32, #tpu.memory_space<vmem>>, %arg3: memref<8x1024xf32, #tpu.memory_space<vmem>>, %arg4: memref<8x1xf32, #tpu.memory_space<vmem>>, %arg5: memref<1x8x8xf32, #tpu.memory_space<vmem>>, %arg6: memref<8x8xf32, #tpu.memory_space<vmem>>) attributes {dimension_semantics = [#tpu.dimension_semantics<parallel>, #tpu.dimension_semantics<arbitrary>], iteration_bounds = array<i64: 1, 1>, scalar_prefetch = 0 : i64, scratch_operands = 1 : i64, tpu.core_type = #tpu.core_type<tc>, window_params = [{transform_indices = @transform_0, window_bounds = array<i64: 8, 1024>}, {transform_indices = @transform_1, window_bounds = array<i64: 8, 1024>}, {pipeline_mode = #tpu.pipeline_mode<synchronous>, transform_indices = @transform_2, window_bounds = array<i64: 8, 1>}, {transform_indices = @transform_3, window_bounds = array<i64: 1, 8, 8>}]} {
    %c0_i32 = arith.constant 0 : i32
    %0 = arith.cmpi eq, %arg1, %c0_i32 : i32
    %1 = arith.extui %0 : i1 to i32
    %c0_i32_0 = arith.constant 0 : i32
    %2 = arith.cmpi ne, %1, %c0_i32_0 : i32
    scf.if %2 {
      %cst_10 = arith.constant 0.000000e+00 : f32
      %14 = vector.broadcast %cst_10 : f32 to vector<8x8xf32>
      %c0_11 = arith.constant 0 : index
      %c0_12 = arith.constant 0 : index
      %15 = vector.load %arg6[%c0_11, %c0_12] : memref<8x8xf32, #tpu.memory_space<vmem>>, vector<8x8xf32>
      tpu.vector_store %arg6[%c0_11, %c0_12], %14 {strides = array<i32>} : memref<8x8xf32, #tpu.memory_space<vmem>>, vector<8x8xf32>,
    } else {
    }
    %c0 = arith.constant 0 : index
    %c0_1 = arith.constant 0 : index
    %3 = vector.load %arg2[%c0, %c0_1] : memref<8x1024xf32, #tpu.memory_space<vmem>>, vector<8x1024xf32>
    %c0_2 = arith.constant 0 : index
    %c0_3 = arith.constant 0 : index
    %4 = vector.load %arg3[%c0_2, %c0_3] : memref<8x1024xf32, #tpu.memory_space<vmem>>, vector<8x1024xf32>
    %c0_4 = arith.constant 0 : index
    %c0_5 = arith.constant 0 : index
    %5 = vector.load %arg6[%c0_4, %c0_5] : memref<8x8xf32, #tpu.memory_space<vmem>>, vector<8x8xf32>
    %6 = arith.truncf %4 : vector<8x1024xf32> to vector<8x1024xbf16>
    %7 = arith.truncf %3 : vector<8x1024xf32> to vector<8x1024xbf16>
    %cst = arith.constant dense<0.000000e+00> : vector<8x8xf32>
    %8 = tpu.matmul %6, %7, %cst {dimension_numbers = #tpu.dot_dimension_numbers<[1], [1], [0], [0], [0, 0, 1, 0], [], []>} : vector<8x1024xbf16>, vector<8x1024xbf16>, vector<8x8xf32> -> vector<8x8xf32>
    %9 = arith.addf %5, %8 : vector<8x8xf32>
    %c0_6 = arith.constant 0 : index
    %c0_7 = arith.constant 0 : index
    %10 = vector.load %arg6[%c0_6, %c0_7] : memref<8x8xf32, #tpu.memory_space<vmem>>, vector<8x8xf32>
    tpu.vector_store %arg6[%c0_6, %c0_7], %9 {strides = array<i32>} : memref<8x8xf32, #tpu.memory_space<vmem>>, vector<8x8xf32>,
    %c0_i32_8 = arith.constant 0 : i32
    %11 = arith.cmpi eq, %arg1, %c0_i32_8 : i32
    %12 = arith.extui %11 : i1 to i32
    %c0_i32_9 = arith.constant 0 : i32
    %13 = arith.cmpi ne, %12, %c0_i32_9 : i32
    scf.if %13 {
      %c0_10 = arith.constant 0 : index
      %c0_11 = arith.constant 0 : index
      %14 = vector.load %arg6[%c0_10, %c0_11] : memref<8x8xf32, #tpu.memory_space<vmem>>, vector<8x8xf32>
      %c0_12 = arith.constant 0 : index
      %c0_13 = arith.constant 0 : index
      %15 = vector.load %arg4[%c0_12, %c0_13] : memref<8x1xf32, #tpu.memory_space<vmem>>, vector<8x1xf32>
      %16 = vector.broadcast %15 : vector<8x1xf32> to vector<8x8xf32>
      %17 = arith.addf %14, %16 : vector<8x8xf32>
      %cst_14 = arith.constant 0.000000e+00 : f32
      %18 = vector.broadcast %cst_14 : f32 to vector<8x8xf32>
      %19 = arith.maximumf %17, %18 : vector<8x8xf32>
      %20 = vector.broadcast %cst_14 : f32 to vector<8x8xf32>
      %21 = arith.subf %17, %20 : vector<8x8xf32>
      %22 = arith.cmpf one, %21, %21 : vector<8x8xf32>
      %23 = vector.broadcast %cst_14 : f32 to vector<8x8xf32>
      %24 = arith.addf %17, %23 : vector<8x8xf32>
      %25 = math.absf %21 : vector<8x8xf32>
      %cst_15 = arith.constant 0.000000e+00 : f32
      %26 = vector.broadcast %cst_15 : f32 to vector<8x8xf32>
      %27 = arith.subf %26, %25 : vector<8x8xf32>
      %28 = math.exp %27 : vector<8x8xf32>
      %29 = math.log1p %28 : vector<8x8xf32>
      %30 = arith.addf %19, %29 : vector<8x8xf32>
      %31 = arith.select %22, %24, %30 : vector<8x8xi1>, vector<8x8xf32>
      %cst_16 = arith.constant dense<0.000000e+00> : vector<8xf32>
      %32 = vector.multi_reduction <add>, %31, %cst_16 [0] : vector<8x8xf32> to vector<8xf32>
      %33 = vector.shape_cast %32 : vector<8xf32> to vector<1x8xf32>
      %cst_17 = arith.constant 8.000000e+00 : f32
      %34 = vector.broadcast %cst_17 : f32 to vector<1x8xf32>
      %35 = arith.addf %33, %34 : vector<1x8xf32>
      %cst_18 = arith.constant 0.000000e+00 : f32
      %36 = vector.broadcast %cst_18 : f32 to vector<1x8xf32>
      %37 = arith.subf %36, %35 : vector<1x8xf32>
      %38 = vector.shape_cast %37 : vector<1x8xf32> to vector<1x1x8xf32>
      %39 = vector.broadcast %38 : vector<1x1x8xf32> to vector<1x8x8xf32>
      %c0_19 = arith.constant 0 : index
      %c0_20 = arith.constant 0 : index
      %c0_21 = arith.constant 0 : index
      %40 = vector.load %arg5[%c0_19, %c0_20, %c0_21] : memref<1x8x8xf32, #tpu.memory_space<vmem>>, vector<1x8x8xf32>
      tpu.vector_store %arg5[%c0_19, %c0_20, %c0_21], %39 {strides = array<i32>} : memref<1x8x8xf32, #tpu.memory_space<vmem>>, vector<1x8x8xf32>,
    } else {
    }
    return
  }
  func.func @transform_0(%arg0: i32, %arg1: i32) -> (i32, i32) {
    %c0_i32 = arith.constant 0 : i32
    return %arg0, %arg1 : i32, i32
  }
  func.func @transform_1(%arg0: i32, %arg1: i32) -> (i32, i32) {
    %c0_i32 = arith.constant 0 : i32
    %c0_i32_0 = arith.constant 0 : i32
    return %c0_i32, %arg1 : i32, i32
  }
  func.func @transform_2(%arg0: i32, %arg1: i32) -> (i32, i32) {
    %c0_i32 = arith.constant 0 : i32
    %c0_i32_0 = arith.constant 0 : i32
    %c0_i32_1 = arith.constant 0 : i32
    return %c0_i32, %c0_i32_0 : i32, i32
  }
  func.func @transform_3(%arg0: i32, %arg1: i32) -> (i32, i32, i32) {
    %c0_i32 = arith.constant 0 : i32
    %c0_i32_0 = arith.constant 0 : i32
    %c0_i32_1 = arith.constant 0 : i32
    return %arg0, %c0_i32, %c0_i32_0 : i32, i32, i32
  }
}

</mosaic_0001>

<llo_original>
// kernel: tpu_custom_call.1
$region0: #{tpu_custom_call.1}
  #allocation0 [shape = 'u32[]', space=smem, size = 0x4, offset = 0x4, fixed_abs, tag = 'smem constant byte address 0x4 - core index']
  #allocation1 [shape = 'u32[144,128]{1,0:T(1,128)}', space=vmem, size = 0x12000, scoped, tag = 'internal scratch']
  #allocation2 [shape = 'f32[8,8]{1,0:T(8,128)}', space=vmem, size = 0x1000, scoped, tag = 'scratch operand']
  %s0 = inlined_call_operand.hbm [shape: f32[2,1024], index: 0, kind: input, shape index: {}]
  %s1 = inlined_call_operand.hbm [shape: f32[8,1024], index: 1, kind: input, shape index: {}]
  %s2 = inlined_call_operand.vmem [shape: f32[8,1], index: 2, kind: input, shape index: {}]
  %s3 = inlined_call_operand.hbm [shape: f32[1,8,8], index: 3, kind: output, shape index: {}]
  %s4 = sld [smem:[#allocation0]]
  $region38: #{tpu_custom_call.1} parent=0
    _
  %s6 = ssub.s32 1, %s4
  %s7 = scalar_select 0, %s6, %s4
  $region1: #{tpu_custom_call.1} parent=0
    #allocation3 [shape = 'u8[32768]{0}', space=vmem, size = 0x8000, scoped, tag = 'input window, operand 0, single buffered']
    #allocation4 [shape = 's32[1]{0}', space=sflag, size = 0x4, scoped, tag = 'scoped memory for tpu_custom_call.1']
    #allocation5 [shape = 's32[1]{0}', space=sflag, size = 0x4, scoped, tag = 'scoped memory for tpu_custom_call.1']
    #allocation6 [shape = 'u8[32768]{0}', space=vmem, size = 0x8000, scoped, tag = 'input window, operand 1, single buffered']
    #allocation7 [shape = 's32[1]{0}', space=sflag, size = 0x4, scoped, tag = 'scoped memory for tpu_custom_call.1']
    #allocation8 [shape = 'u8[4096]{0}', space=vmem, size = 0x1000, scoped, tag = 'output window, operand 0, single buffered']
    %8 = vsyncpa [#allocation4], 0
    %9 = vsyncpa [#allocation7], 0
    %10 = vsyncpa [#allocation5], 0
    // Predicated region
    $region2: #{tpu_custom_call.1} parent=1 // pred_check
      _
    $region3: #{tpu_custom_call.1} parent=1 // pred_check_branch
      %12 = sbr.rel (0) target = $region5
    $region4: #{tpu_custom_call.1} parent=1 // pred_region
      %s14 = ssub.s32 1024, 256
      %15 = vsyncadd [#allocation4], %s14
      %s16 = sshll.u32 [#allocation3], 4
      %s17 = int_to_ptr.vmem [resolvable:$true] %s16
      %22 = dma.hbm_to_vmem [thread:$0]  %s0, 256, %s17, [#allocation4], 256, 256, 16
    $region5: #{tpu_custom_call.1} parent=1 // pred_fallthru
      _
    // Predicated region
    $region6: #{tpu_custom_call.1} parent=1 // pred_check
      _
    $region7: #{tpu_custom_call.1} parent=1 // pred_check_branch
      %24 = sbr.rel (0) target = $region9
    $region8: #{tpu_custom_call.1} parent=1 // pred_region
      %s26 = ssub.s32 1024, 1024
      %27 = vsyncadd [#allocation7], %s26
      %s29 = sshll.u32 [#allocation6], 4
      %s30 = int_to_ptr.vmem [resolvable:$true] %s29
      %32 = dma.hbm_to_vmem [thread:$0]  %s1, 1024, %s30, [#allocation7]
    $region9: #{tpu_custom_call.1} parent=1 // pred_fallthru
      _
    // Predicated region
    $region10: #{tpu_custom_call.1} parent=1 // pred_check
      _
    $region11: #{tpu_custom_call.1} parent=1 // pred_check_branch
      %34 = sbr.rel (0) target = $region13
    $region12: #{tpu_custom_call.1} parent=1 // pred_region
      _
    $region13: #{tpu_custom_call.1} parent=1 // pred_fallthru
      _
    // Predicated region
    $region14: #{tpu_custom_call.1} parent=1 // pred_check
      _
    $region15: #{tpu_custom_call.1} parent=1 // pred_check_branch
      %36 = sbr.rel (0) target = $region17
    $region16: #{tpu_custom_call.1} parent=1 // pred_region
      %37 = dma.done [#allocation4], 1024
    $region17: #{tpu_custom_call.1} parent=1 // pred_fallthru
      _
    // Predicated region
    $region18: #{tpu_custom_call.1} parent=1 // pred_check
      _
    $region19: #{tpu_custom_call.1} parent=1 // pred_check_branch
      %39 = sbr.rel (0) target = $region21
    $region20: #{tpu_custom_call.1} parent=1 // pred_region
      %40 = dma.done [#allocation7], 1024
    $region21: #{tpu_custom_call.1} parent=1 // pred_fallthru
      _
    %p42 = scmp.eq.s32.totalorder 0, 0
    // Predicated region
    $region22: #{tpu_custom_call.1} parent=1 // pred_check
      %p43 = pneg %p42
    $region23: #{tpu_custom_call.1} parent=1 // pred_check_branch
      %45 = sbr.rel (%p43) target = $region25
    $region24: #{tpu_custom_call.1} parent=1 // pred_region
      %vm46 = vcmask 64512
      %47 = vst.msk [vmem:[#allocation2] sm:$0xff] %vm46, 0.0
    $region25: #{tpu_custom_call.1} parent=1 // pred_fallthru
      _
    %v48 = vld [vmem:[#allocation3] sm:$0xff]
    %v49 = vld [vmem:[#allocation3 + $0x8] sm:$0xff]
    %v50 = vld [vmem:[#allocation3 + $0x10] sm:$0xff]
    %v51 = vld [vmem:[#allocation3 + $0x18] sm:$0xff]
    %v52 = vld [vmem:[#allocation3 + $0x20] sm:$0xff]
    %v53 = vld [vmem:[#allocation3 + $0x28] sm:$0xff]
    %v54 = vld [vmem:[#allocation3 + $0x30] sm:$0xff]
    %v55 = vld [vmem:[#allocation3 + $0x38] sm:$0xff]
    %v56 = vld [vmem:[#allocation6] sm:$0xff]
    %v57 = vld [vmem:[#allocation6 + $0x8] sm:$0xff]
    %v58 = vld [vmem:[#allocation6 + $0x10] sm:$0xff]
    %v59 = vld [vmem:[#allocation6 + $0x18] sm:$0xff]
    %v60 = vld [vmem:[#allocation6 + $0x20] sm:$0xff]
    %v61 = vld [vmem:[#allocation6 + $0x28] sm:$0xff]
    %v62 = vld [vmem:[#allocation6 + $0x30] sm:$0xff]
    %v63 = vld [vmem:[#allocation6 + $0x38] sm:$0xff]
    %v64 = vld [vmem:[#allocation2] sm:$0xff]
    %v65 = vpack.c.bf16 %v56, %v56
    %v66 = vpack.c.bf16 %v57, %v57
    %v67 = vpack.c.bf16 %v58, %v58
    %v68 = vpack.c.bf16 %v59, %v59
    %v69 = vpack.c.bf16 %v60, %v60
    %v70 = vpack.c.bf16 %v61, %v61
    %v71 = vpack.c.bf16 %v62, %v62
    %v72 = vpack.c.bf16 %v63, %v63
    %v81 = vcombine.low %v48, %v50
    %v82 = vcombine.high %v48, %v50
    %v83 = vcombine.low %v52, %v54
    %v84 = vcombine.high %v52, %v54
    %v86 = vunpack.c.l.s4 1983009808
    %v87 = vunpack.c.0.s8 %v86
    %v88 = vlaneseq
    %v89 = vshrl.u32 %v88, 7
    %v90 = vsub.s32 %v87, %v89
    %v91 = vrot.slane %v81, %v90
    %v93 = vunpack.c.l.s4 1983009808
    %v94 = vunpack.c.0.s8 %v93
    %v95 = vlaneseq
    %v96 = vshrl.u32 %v95, 7
    %v97 = vsub.s32 %v94, %v96
    %v98 = vrot.slane %v82, %v97
    %v100 = vunpack.c.l.s4 1983009808
    %v101 = vunpack.c.0.s8 %v100
    %v102 = vlaneseq
    %v103 = vshrl.u32 %v102, 7
    %v104 = vsub.s32 %v101, %v103
    %v105 = vrot.slane %v83, %v104
    %v107 = vunpack.c.l.s4 1983009808
    %v108 = vunpack.c.0.s8 %v107
    %v109 = vlaneseq
    %v110 = vshrl.u32 %v109, 7
    %v111 = vsub.s32 %v108, %v110
    %v112 = vrot.slane %v84, %v111
    %v113 = vcombine.low %v91, %v105
    %v114 = vcombine.high %v91, %v105
    %v115 = vcombine.low %v98, %v112
    %v116 = vcombine.high %v98, %v112
    %v117 = vcombine.low %v49, %v51
    %v118 = vcombine.high %v49, %v51
    %v119 = vcombine.low %v53, %v55
    %v120 = vcombine.high %v53, %v55
    %v122 = vunpack.c.l.s4 1983009808
    %v123 = vunpack.c.0.s8 %v122
    %v124 = vlaneseq
    %v125 = vshrl.u32 %v124, 7
    %v126 = vsub.s32 %v123, %v125
    %v127 = vrot.slane %v117, %v126
    %v129 = vunpack.c.l.s4 1983009808
    %v130 = vunpack.c.0.s8 %v129
    %v131 = vlaneseq
    %v132 = vshrl.u32 %v131, 7
    %v133 = vsub.s32 %v130, %v132
    %v134 = vrot.slane %v118, %v133
    %v136 = vunpack.c.l.s4 1983009808
    %v137 = vunpack.c.0.s8 %v136
    %v138 = vlaneseq
    %v139 = vshrl.u32 %v138, 7
    %v140 = vsub.s32 %v137, %v139
    %v141 = vrot.slane %v119, %v140
    %v143 = vunpack.c.l.s4 1983009808
    %v144 = vunpack.c.0.s8 %v143
    %v145 = vlaneseq
    %v146 = vshrl.u32 %v145, 7
    %v147 = vsub.s32 %v144, %v146
    %v148 = vrot.slane %v120, %v147
    %v149 = vcombine.low %v127, %v141
    %v150 = vcombine.high %v127, %v141
    %v151 = vcombine.low %v134, %v148
    %v152 = vcombine.high %v134, %v148
    %v161 = vpack.c.bf16 %v113, %v113
    %v162 = vpack.c.bf16 %v114, %v114
    %v163 = vpack.c.bf16 %v115, %v115
    %v164 = vpack.c.bf16 %v116, %v116
    %v165 = vpack.c.bf16 %v149, %v149
    %v166 = vpack.c.bf16 %v150, %v150
    %v167 = vpack.c.bf16 %v151, %v151
    %v168 = vpack.c.bf16 %v152, %v152
    %169 = vmatprep.subr.bf16.mxu0 %v162
    %170 = vmatpush1.bf16.xpose.msra.mxu0 %v161
    %171 = vmatprep.subr.bf16.mxu0 0
    %172 = vmatpush1.bf16.xpose.msra.mxu0 0
    %173 = vmatprep.subr.bf16.mxu0 0
    %174 = vmatpush1.bf16.xpose.msra.mxu0 0
    %175 = vmatprep.subr.bf16.mxu0 0
    %176 = vmatpush1.bf16.xpose.msra.mxu0 0
    %177 = vmatprep.subr.bf16.mxu0 0
    %178 = vmatpush1.bf16.xpose.msra.mxu0 0
    %179 = vmatprep.subr.bf16.mxu0 0
    %180 = vmatpush1.bf16.xpose.msra.mxu0 0
    %181 = vmatprep.subr.bf16.mxu0 0
    %182 = vmatpush1.bf16.xpose.msra.mxu0 0
    %183 = vmatprep.subr.bf16.mxu0 0
    %184 = vmatpush1.bf16.xpose.msra.mxu0 0
    %185 = vmatprep.subr.bf16.mxu0 0
    %186 = vmatpush1.bf16.xpose.msra.mxu0 0
    %187 = vmatprep.subr.bf16.mxu0 0
    %188 = vmatpush1.bf16.xpose.msra.mxu0 0
    %189 = vmatprep.subr.bf16.mxu0 0
    %190 = vmatpush1.bf16.xpose.msra.mxu0 0
    %191 = vmatprep.subr.bf16.mxu0 0
    %192 = vmatpush1.bf16.xpose.msra.mxu0 0
    %193 = vmatprep.subr.bf16.mxu0 0
    %194 = vmatpush1.bf16.xpose.msra.mxu0 0
    %195 = vmatprep.subr.bf16.mxu0 0
    %196 = vmatpush1.bf16.xpose.msra.mxu0 0
    %197 = vmatprep.subr.bf16.mxu0 0
    %198 = vmatpush1.bf16.xpose.msra.mxu0 0
    %199 = vmatprep.subr.bf16.mxu0 0
    %200 = vmatpush1.bf16.xpose.msra.mxu0 0
    %201 = vmatprep.mubr.bf16.mxu0 %v66
    %202 = vmatmul.mubr.bf16.gmra.mrb[0].mxu0 %v65
    %v203 = vpop.f32.mrb[0].mxu0
    %v204 = vadd.f32 0.0, %v203
    %v205 = vpop.f32.mrb[0].mxu0
    %v206 = vpop.f32.mrb[0].mxu0
    %v207 = vpop.f32.mrb[0].mxu0
    %208 = vdwg.mxu0
    %209 = vmatprep.subr.bf16.mxu0 %v164
    %210 = vmatpush1.bf16.xpose.msra.mxu0 %v163
    %211 = vmatprep.subr.bf16.mxu0 0
    %212 = vmatpush1.bf16.xpose.msra.mxu0 0
    %213 = vmatprep.subr.bf16.mxu0 0
    %214 = vmatpush1.bf16.xpose.msra.mxu0 0
    %215 = vmatprep.subr.bf16.mxu0 0
    %216 = vmatpush1.bf16.xpose.msra.mxu0 0
    %217 = vmatprep.subr.bf16.mxu0 0
    %218 = vmatpush1.bf16.xpose.msra.mxu0 0
    %219 = vmatprep.subr.bf16.mxu0 0
    %220 = vmatpush1.bf16.xpose.msra.mxu0 0
    %221 = vmatprep.subr.bf16.mxu0 0
    %222 = vmatpush1.bf16.xpose.msra.mxu0 0
    %223 = vmatprep.subr.bf16.mxu0 0
    %224 = vmatpush1.bf16.xpose.msra.mxu0 0
    %225 = vmatprep.subr.bf16.mxu0 0
    %226 = vmatpush1.bf16.xpose.msra.mxu0 0
    %227 = vmatprep.subr.bf16.mxu0 0
    %228 = vmatpush1.bf16.xpose.msra.mxu0 0
    %229 = vmatprep.subr.bf16.mxu0 0
    %230 = vmatpush1.bf16.xpose.msra.mxu0 0
    %231 = vmatprep.subr.bf16.mxu0 0
    %232 = vmatpush1.bf16.xpose.msra.mxu0 0
    %233 = vmatprep.subr.bf16.mxu0 0
    %234 = vmatpush1.bf16.xpose.msra.mxu0 0
    %235 = vmatprep.subr.bf16.mxu0 0
    %236 = vmatpush1.bf16.xpose.msra.mxu0 0
    %237 = vmatprep.subr.bf16.mxu0 0
    %238 = vmatpush1.bf16.xpose.msra.mxu0 0
    %239 = vmatprep.subr.bf16.mxu0 0
    %240 = vmatpush1.bf16.xpose.msra.mxu0 0
    %241 = vmatprep.mubr.bf16.mxu0 %v68
    %242 = vmatmul.mubr.bf16.gmra.mrb[0].mxu0 %v67
    %v243 = vpop.f32.mrb[0].mxu0
    %v244 = vadd.f32 %v204, %v243
    %v245 = vpop.f32.mrb[0].mxu0
    %v246 = vpop.f32.mrb[0].mxu0
    %v247 = vpop.f32.mrb[0].mxu0
    %248 = vdwg.mxu0
    %249 = vmatprep.subr.bf16.mxu0 %v166
    %250 = vmatpush1.bf16.xpose.msra.mxu0 %v165
    %251 = vmatprep.subr.bf16.mxu0 0
    %252 = vmatpush1.bf16.xpose.msra.mxu0 0
    %253 = vmatprep.subr.bf16.mxu0 0
    %254 = vmatpush1.bf16.xpose.msra.mxu0 0
    %255 = vmatprep.subr.bf16.mxu0 0
    %256 = vmatpush1.bf16.xpose.msra.mxu0 0
    %257 = vmatprep.subr.bf16.mxu0 0
    %258 = vmatpush1.bf16.xpose.msra.mxu0 0
    %259 = vmatprep.subr.bf16.mxu0 0
    %260 = vmatpush1.bf16.xpose.msra.mxu0 0
    %261 = vmatprep.subr.bf16.mxu0 0
    %262 = vmatpush1.bf16.xpose.msra.mxu0 0
    %263 = vmatprep.subr.bf16.mxu0 0
    %264 = vmatpush1.bf16.xpose.msra.mxu0 0
    %265 = vmatprep.subr.bf16.mxu0 0
    %266 = vmatpush1.bf16.xpose.msra.mxu0 0
    %267 = vmatprep.subr.bf16.mxu0 0
    %268 = vmatpush1.bf16.xpose.msra.mxu0 0
    %269 = vmatprep.subr.bf16.mxu0 0
    %270 = vmatpush1.bf16.xpose.msra.mxu0 0
    %271 = vmatprep.subr.bf16.mxu0 0
    %272 = vmatpush1.bf16.xpose.msra.mxu0 0
    %273 = vmatprep.subr.bf16.mxu0 0
    %274 = vmatpush1.bf16.xpose.msra.mxu0 0
    %275 = vmatprep.subr.bf16.mxu0 0
    %276 = vmatpush1.bf16.xpose.msra.mxu0 0
    %277 = vmatprep.subr.bf16.mxu0 0
    %278 = vmatpush1.bf16.xpose.msra.mxu0 0
    %279 = vmatprep.subr.bf16.mxu0 0
    %280 = vmatpush1.bf16.xpose.msra.mxu0 0
    %281 = vmatprep.mubr.bf16.mxu0 %v70
    %282 = vmatmul.mubr.bf16.gmra.mrb[0].mxu0 %v69
    %v283 = vpop.f32.mrb[0].mxu0
    %v284 = vadd.f32 %v244, %v283
    %v285 = vpop.f32.mrb[0].mxu0
    %v286 = vpop.f32.mrb[0].mxu0
    %v287 = vpop.f32.mrb[0].mxu0
    %288 = vdwg.mxu0
    %289 = vmatprep.subr.bf16.mxu0 %v168
    %290 = vmatpush1.bf16.xpose.msra.mxu0 %v167
    %291 = vmatprep.subr.bf16.mxu0 0
    %292 = vmatpush1.bf16.xpose.msra.mxu0 0
    %293 = vmatprep.subr.bf16.mxu0 0
    %294 = vmatpush1.bf16.xpose.msra.mxu0 0
    %295 = vmatprep.subr.bf16.mxu0 0
    %296 = vmatpush1.bf16.xpose.msra.mxu0 0
    %297 = vmatprep.subr.bf16.mxu0 0
    %298 = vmatpush1.bf16.xpose.msra.mxu0 0
    %299 = vmatprep.subr.bf16.mxu0 0
    %300 = vmatpush1.bf16.xpose.msra.mxu0 0
    %301 = vmatprep.subr.bf16.mxu0 0
    %302 = vmatpush1.bf16.xpose.msra.mxu0 0
    %303 = vmatprep.subr.bf16.mxu0 0
    %304 = vmatpush1.bf16.xpose.msra.mxu0 0
    %305 = vmatprep.subr.bf16.mxu0 0
    %306 = vmatpush1.bf16.xpose.msra.mxu0 0
    %307 = vmatprep.subr.bf16.mxu0 0
    %308 = vmatpush1.bf16.xpose.msra.mxu0 0
    %309 = vmatprep.subr.bf16.mxu0 0
    %310 = vmatpush1.bf16.xpose.msra.mxu0 0
    %311 = vmatprep.subr.bf16.mxu0 0
    %312 = vmatpush1.bf16.xpose.msra.mxu0 0
    %313 = vmatprep.subr.bf16.mxu0 0
    %314 = vmatpush1.bf16.xpose.msra.mxu0 0
    %315 = vmatprep.subr.bf16.mxu0 0
    %316 = vmatpush1.bf16.xpose.msra.mxu0 0
    %317 = vmatprep.subr.bf16.mxu0 0
    %318 = vmatpush1.bf16.xpose.msra.mxu0 0
    %319 = vmatprep.subr.bf16.mxu0 0
    %320 = vmatpush1.bf16.xpose.msra.mxu0 0
    %321 = vmatprep.mubr.bf16.mxu0 %v72
    %322 = vmatmul.mubr.bf16.gmra.mrb[0].mxu0 %v71
    %v323 = vpop.f32.mrb[0].mxu0
    %v324 = vadd.f32 %v284, %v323
    %v325 = vpop.f32.mrb[0].mxu0
    %v326 = vpop.f32.mrb[0].mxu0
    %v327 = vpop.f32.mrb[0].mxu0
    %328 = vdwg.mxu0
    %v329 = vadd.f32 %v64, %v324
    %vm330 = vcmask 64512
    %331 = vst.msk [vmem:[#allocation2] sm:$0xff] %vm330, %v329
    // Predicated region
    $region26: #{tpu_custom_call.1} parent=1 // pred_check
      %p332 = pneg %p42
    $region27: #{tpu_custom_call.1} parent=1 // pred_check_branch
      %334 = sbr.rel (%p332) target = $region29
    $region28: #{tpu_custom_call.1} parent=1 // pred_region
      %v335 = vld [vmem:[#allocation2] sm:$0xff]
      %v336 = vld [vmem:[%s2] sm:$0xff]
      %338 = vset.pattern.permute.xlu0 0
      %339 = vperm.xlu0 %338, %v336
      %v340 = vpop.permute.xlu0 %339
      %v342 = vadd.f32 %v335, %v340
      %v343 = vmax.f32 %v342, 0.0
      %vm344 = vcmp.ne.f32.partialorder %v342, %v342
      %v345 = vadd.f32 %v342, 0.0
      %v346 = vand.u32 2147483647, %v342
      %v347 = vsub.f32 0.0, %v346
      %v348 = vmul.f32 %v347, 1.442695
      %v349 = vpow.pop %v348
      %v350 = vadd.f32 %v349, 1.0
      %v351 = vlog2.pop %v350
      %v352 = vmul.f32 %v351, 0.6931472
      %v353 = vmul.f32 -0.5, %v349
      %v354 = vadd.f32 %v353, 1.0
      %v355 = vmul.f32 %v354, %v349
      %v356 = vand.u32 2147483647, %v349
      %vm357 = vcmp.lt.f32.partialorder %v356, 0.0004427343
      %v358 = vsel %vm357, %v355, %v352
      %v359 = vadd.f32 %v343, %v358
      %v360 = vsel %vm344, %v345, %v359
      %v361 = vsel %vm330, %v360, 0.0
      %v362 = vrot.slane %v361, 4
      %v363 = vadd.f32 %v361, %v362
      %v364 = vrot.slane %v363, 2
      %v365 = vadd.f32 %v363, %v364
      %v366 = vrot.slane %v365, 1
      %v367 = vadd.f32 %v365, %v366
      %v368 = vadd.f32 %v367, 8.0
      %v369 = vsub.f32 0.0, %v368
      %370 = vst.msk [vmem:[#allocation8] sm:$0xff] %vm330, %v369
    $region29: #{tpu_custom_call.1} parent=1 // pred_fallthru
      _
    // Predicated region
    $region30: #{tpu_custom_call.1} parent=1 // pred_check
      _
    $region31: #{tpu_custom_call.1} parent=1 // pred_check_branch
      %372 = sbr.rel (0) target = $region33
    $region32: #{tpu_custom_call.1} parent=1 // pred_region
      %s374 = ssub.s32 128, 128
      %375 = vsyncadd [#allocation5], %s374
      %s377 = sshll.u32 [#allocation8], 4
      %s378 = int_to_ptr.vmem [resolvable:$true] %s377
      %380 = dma.vmem_to_hbm [thread:$0]  %s378, 128, %s3, [#allocation5]
    $region33: #{tpu_custom_call.1} parent=1 // pred_fallthru
      _
    // Predicated region
    $region34: #{tpu_custom_call.1} parent=1 // pred_check
      _
    $region35: #{tpu_custom_call.1} parent=1 // pred_check_branch
      %382 = sbr.rel (0) target = $region37
    $region36: #{tpu_custom_call.1} parent=1 // pred_region
      %383 = dma.done [#allocation5], 128
    $region37: #{tpu_custom_call.1} parent=1 // pred_fallthru
      _
    %384 = vsyncpa [#allocation4], 1
    %385 = vsyncpa [#allocation7], 1
    %386 = vsyncpa [#allocation5], 1

</llo_original>
